<compile_context>
chip_gen: v7x
topology: tpu7x:2x2x1
jax: 0.10.0
libtpu: 0.0.40
codegen_flags: <defaults>
</compile_context>

<pallas_src>
import jax
import jax.numpy as jnp
from jax.experimental import pallas as pl
from jax.experimental.pallas import tpu as pltpu


def _make_bce_kernel(rows, tile_rows, acc_rows, lane, needs_mask, binary_targets):
    """Build the per-tile BCE partial-sum kernel (all sizing baked in statically)."""

    def kernel(z_ref, x_ref, out_ref):
        k = pl.program_id(0)

        @pl.when(k == 0)
        def _():
            out_ref[...] = jnp.zeros_like(out_ref)

        z = z_ref[...].astype(jnp.float32)
        x = x_ref[...].astype(jnp.float32)

        if binary_targets:
            # x in {0, 1}: one EUP log per element instead of two.
            term = jnp.maximum(jnp.log(jnp.where(x != 0.0, z, 1.0 - z)), -100.0)
        else:
            # torch.nn.BCELoss clamps each log term at -100 per element.
            log_z = jnp.maximum(jnp.log(z), -100.0)
            log_1mz = jnp.maximum(jnp.log(1.0 - z), -100.0)
            # x*log(z) + (1-x)*log(1-z) == x*(log z - log(1-z)) + log(1-z)
            term = x * (log_z - log_1mz) + log_1mz

        if needs_mask:
            # Last grid step's block overruns the (rows, lane) array; the OOB rows of
            # the input buffers hold unspecified data, so zero their contribution by
            # global row index (rows is a compile-time constant — no prefetch needed).
            row_ids = k * tile_rows + jax.lax.broadcasted_iota(
                jnp.int32, term.shape, 0)
            term = jnp.where(row_ids < rows, term, 0.0)

        # Fold the (tile_rows, lane) tile onto the (acc_rows, lane) accumulator:
        # pure elementwise vreg adds, no XLU cross-lane work in the hot loop.
        out_ref[...] += jnp.sum(term.reshape(-1, acc_rows, lane), axis=0)

    return kernel


def _bce_sum_pallas(zf, xf, *, binary_targets=False,
                    max_tile_elems=512 * 1024,
                    vmem_limit_bytes=32 * 1024 * 1024):
    """sum( x*log(z) + (1-x)*log(1-z) ) with logs clamped at -100 (torch BCE).

    zf / xf are flat 1-D arrays of equal length.  Returns the (positive) sum, f32.
    """
    n = zf.shape[0]

    # ---- lane width: largest of {1024..128} dividing N, so the (rows, lane) reshape
    # is a free bitcast (no full-array copy before the kernel). ----
    lane = None
    for cand in (1024, 512, 256, 128):
        if n % cand == 0:
            lane = cand
            break
    if lane is None:
        # Rare fallback (N not a multiple of 128): pad up to the next 128-elem
        # boundary with (z=1, x=1) which contributes exactly 0 to the clamped BCE sum.
        lane = 128
        pad = (-n) % lane
        zf = jnp.pad(zf, (0, pad), constant_values=1)
        xf = jnp.pad(xf, (0, pad), constant_values=1)
        n = n + pad

    rows = n // lane
    z2 = zf.reshape(rows, lane)   # free: n % lane == 0
    x2 = xf.reshape(rows, lane)

    # ---- tile sizing: sublane multiple of 8 (or full extent when rows < 8),
    # capped at ~2 MiB f32 per input block. ----
    if rows < 8:
        tile_rows = rows                                  # single full-extent block
    else:
        cap = max(8, (max_tile_elems // lane) // 8 * 8)
        tile_rows = min(cap, (rows // 8) * 8)
    acc_rows = min(8, tile_rows)
    n_tiles = pl.cdiv(rows, tile_rows)
    needs_mask = (rows % tile_rows) != 0                  # only the last block is partial

    kernel = _make_bce_kernel(rows, tile_rows, acc_rows, lane, needs_mask,
                              binary_targets)

    in_bytes = rows * lane * (z2.dtype.itemsize + x2.dtype.itemsize)
    cost = pl.CostEstimate(
        flops=int(6 * rows * lane),
        transcendentals=int((1 if binary_targets else 2) * rows * lane),
        bytes_accessed=int(in_bytes + acc_rows * lane * 4),
    )

    partials = pl.pallas_call(
        kernel,
        out_shape=jax.ShapeDtypeStruct((acc_rows, lane), jnp.float32),
        grid=(n_tiles,),
        in_specs=[
            pl.BlockSpec((tile_rows, lane), lambda k: (k, 0)),   # z tile
            pl.BlockSpec((tile_rows, lane), lambda k: (k, 0)),   # x tile
        ],
        out_specs=pl.BlockSpec((acc_rows, lane), lambda k: (0, 0)),
        compiler_params=pltpu.CompilerParams(
            dimension_semantics=("arbitrary",),   # reduction axis; output resident
            vmem_limit_bytes=vmem_limit_bytes,
        ),
        cost_estimate=cost,
    )(z2, x2)

    # Single cross-lane reduce, once, outside the hot loop.
    return jnp.sum(partials)


def elbo_loss(z, x, mean, cov, *, binary_targets=False):
    """z, x: same shape (e.g. NCHW) with z in (0, 1); mean, cov: (B, L) with cov =
    log-variance.  Returns the scalar f32 ELBO loss.  Set binary_targets=True only
    if x is guaranteed to be in {0, 1} (halves the per-element EUP log count)."""
    bce = -_bce_sum_pallas(z.reshape(-1), x.reshape(-1),
                           binary_targets=binary_targets)

    # KL term: tiny (B, L) reduction — plain JAX, XLA fuses it for free.
    mean_f = mean.astype(jnp.float32)
    cov_f = cov.astype(jnp.float32)
    kl = -0.5 * jnp.sum(1.0 + cov_f - mean_f * mean_f - jnp.exp(cov_f))
    return bce + kl


def _elbo_ref(z, x, mean, cov):
    """Pure-JAX reference (mirrors the PyTorch module)."""
    zf = z.reshape(-1).astype(jnp.float32)
    xf = x.reshape(-1).astype(jnp.float32)
    log_z = jnp.maximum(jnp.log(zf), -100.0)
    log_1mz = jnp.maximum(jnp.log(1.0 - zf), -100.0)
    bce = -jnp.sum(xf * log_z + (1.0 - xf) * log_1mz)
    kl = -0.5 * jnp.sum(1.0 + cov - mean * mean - jnp.exp(cov))
    return bce + kl


if __name__ == "__main__":
    key = jax.random.PRNGKey(0)
    k_z, k_x, k_m, k_c = jax.random.split(key, 4)

    B, C, H, W = 2, 4, 16, 16   # reconstruction / target images (NCHW)
    L = 32                      # latent dim

    # z: decoder output after sigmoid, strictly inside (0, 1)
    z = jax.nn.sigmoid(jax.random.normal(k_z, (B, C, H, W), dtype=jnp.float32))
    # x: binary targets in [0, 1] (binarized-MNIST-style VAE)
    x = (jax.random.uniform(k_x, (B, C, H, W)) > 0.5).astype(jnp.float32)
    mean = jax.random.normal(k_m, (B, L), dtype=jnp.float32)
    cov = jax.random.normal(k_c, (B, L), dtype=jnp.float32)   # log-variance

    loss = jax.block_until_ready(elbo_loss(z, x, mean, cov))
    ref = jax.block_until_ready(_elbo_ref(z, x, mean, cov))
    if not jnp.allclose(loss, ref, rtol=1e-5, atol=1e-2):
        raise AssertionError(f"mismatch (general path): kernel={loss} ref={ref}")

    # Binary-target fast path — identical result for x in {0, 1}.
    loss_bin = jax.block_until_ready(elbo_loss(z, x, mean, cov, binary_targets=True))
    if not jnp.allclose(loss_bin, ref, rtol=1e-5, atol=1e-2):
        raise AssertionError(f"mismatch (binary path): kernel={loss_bin} ref={ref}")

    # Shape whose row count (9) is not a multiple of the 8-row tile: exercises the
    # in-kernel masked partial-last-tile path with zero wrapper-side padding/copies.
    z2 = jax.nn.sigmoid(jax.random.normal(k_z, (3, 3, 32, 32), dtype=jnp.float32))
    x2 = jax.random.uniform(k_x, (3, 3, 32, 32), dtype=jnp.float32)  # soft targets
    loss2 = jax.block_until_ready(elbo_loss(z2, x2, mean, cov))
    ref2 = jax.block_until_ready(_elbo_ref(z2, x2, mean, cov))
    if not jnp.allclose(loss2, ref2, rtol=1e-5, atol=1e-2):
        raise AssertionError(f"mismatch (masked tail): kernel={loss2} ref={ref2}")

    print("KERNEL_OK")
</pallas_src>

<mosaic_0001>
module attributes {stable_mosaic.version = 11 : i64} {
  func.func @kernel(%arg0: i32, %arg1: memref<2x1024xf32, #tpu.memory_space<vmem>>, %arg2: memref<2x1024xf32, #tpu.memory_space<vmem>>, %arg3: memref<2x1024xf32, #tpu.memory_space<vmem>>) attributes {dimension_semantics = [#tpu.dimension_semantics<arbitrary>], iteration_bounds = array<i64: 1>, scalar_prefetch = 0 : i64, scratch_operands = 0 : i64, tpu.core_type = #tpu.core_type<tc>, window_params = [{transform_indices = @transform_0, window_bounds = array<i64: 2, 1024>}, {transform_indices = @transform_1, window_bounds = array<i64: 2, 1024>}, {pipeline_mode = #tpu.pipeline_mode<synchronous>, transform_indices = @transform_2, window_bounds = array<i64: 2, 1024>}]} {
    %c0_i32 = arith.constant 0 : i32
    %0 = arith.cmpi eq, %arg0, %c0_i32 : i32
    %1 = arith.extui %0 : i1 to i32
    %c0_i32_0 = arith.constant 0 : i32
    %2 = arith.cmpi ne, %1, %c0_i32_0 : i32
    scf.if %2 {
      %cst_11 = arith.constant 0.000000e+00 : f32
      %21 = vector.broadcast %cst_11 : f32 to vector<2x1024xf32>
      %c0_12 = arith.constant 0 : index
      %c0_13 = arith.constant 0 : index
      %22 = vector.load %arg3[%c0_12, %c0_13] : memref<2x1024xf32, #tpu.memory_space<vmem>>, vector<2x1024xf32>
      tpu.vector_store %arg3[%c0_12, %c0_13], %21 {strides = array<i32>} : memref<2x1024xf32, #tpu.memory_space<vmem>>, vector<2x1024xf32>,
    } else {
    }
    %c0 = arith.constant 0 : index
    %c0_1 = arith.constant 0 : index
    %3 = vector.load %arg1[%c0, %c0_1] : memref<2x1024xf32, #tpu.memory_space<vmem>>, vector<2x1024xf32>
    %c0_2 = arith.constant 0 : index
    %c0_3 = arith.constant 0 : index
    %4 = vector.load %arg2[%c0_2, %c0_3] : memref<2x1024xf32, #tpu.memory_space<vmem>>, vector<2x1024xf32>
    %5 = math.log %3 : vector<2x1024xf32>
    %cst = arith.constant -1.000000e+02 : f32
    %6 = vector.broadcast %cst : f32 to vector<2x1024xf32>
    %7 = arith.maximumf %5, %6 : vector<2x1024xf32>
    %cst_4 = arith.constant 1.000000e+00 : f32
    %8 = vector.broadcast %cst_4 : f32 to vector<2x1024xf32>
    %9 = arith.subf %8, %3 : vector<2x1024xf32>
    %10 = math.log %9 : vector<2x1024xf32>
    %cst_5 = arith.constant -1.000000e+02 : f32
    %11 = vector.broadcast %cst_5 : f32 to vector<2x1024xf32>
    %12 = arith.maximumf %10, %11 : vector<2x1024xf32>
    %13 = arith.subf %7, %12 : vector<2x1024xf32>
    %14 = arith.mulf %4, %13 : vector<2x1024xf32>
    %15 = arith.addf %14, %12 : vector<2x1024xf32>
    %c0_6 = arith.constant 0 : index
    %c0_7 = arith.constant 0 : index
    %16 = vector.load %arg3[%c0_6, %c0_7] : memref<2x1024xf32, #tpu.memory_space<vmem>>, vector<2x1024xf32>
    %17 = vector.shape_cast %15 : vector<2x1024xf32> to vector<1x2x1024xf32>
    %cst_8 = arith.constant dense<0.000000e+00> : vector<2x1024xf32>
    %18 = vector.multi_reduction <add>, %17, %cst_8 [0] : vector<1x2x1024xf32> to vector<2x1024xf32>
    %19 = arith.addf %16, %18 : vector<2x1024xf32>
    %c0_9 = arith.constant 0 : index
    %c0_10 = arith.constant 0 : index
    %20 = vector.load %arg3[%c0_9, %c0_10] : memref<2x1024xf32, #tpu.memory_space<vmem>>, vector<2x1024xf32>
    tpu.vector_store %arg3[%c0_9, %c0_10], %19 {strides = array<i32>} : memref<2x1024xf32, #tpu.memory_space<vmem>>, vector<2x1024xf32>,
    return
  }
  func.func @transform_0(%arg0: i32) -> (i32, i32) {
    %c0_i32 = arith.constant 0 : i32
    %c0_i32_0 = arith.constant 0 : i32
    return %arg0, %c0_i32 : i32, i32
  }
  func.func @transform_1(%arg0: i32) -> (i32, i32) {
    %c0_i32 = arith.constant 0 : i32
    %c0_i32_0 = arith.constant 0 : i32
    return %arg0, %c0_i32 : i32, i32
  }
  func.func @transform_2(%arg0: i32) -> (i32, i32) {
    %c0_i32 = arith.constant 0 : i32
    %c0_i32_0 = arith.constant 0 : i32
    %c0_i32_1 = arith.constant 0 : i32
    return %c0_i32, %c0_i32_0 : i32, i32
  }
}

</mosaic_0001>

<llo_original>
// kernel: tpu_custom_call.1
$region0: #{tpu_custom_call.1}
  #allocation0 [shape = 'u32[]', space=smem, size = 0x4, offset = 0x4, fixed_abs, tag = 'smem constant byte address 0x4 - core index']
  #allocation1 [shape = 'u32[144,128]{1,0:T(1,128)}', space=vmem, size = 0x12000, scoped, tag = 'internal scratch']
  %s0 = inlined_call_operand.hbm [shape: f32[2,1024], index: 0, kind: input, shape index: {}]
  %s1 = inlined_call_operand.hbm [shape: f32[2,1024], index: 1, kind: input, shape index: {}]
  %s2 = inlined_call_operand.hbm [shape: f32[2,1024], index: 2, kind: output, shape index: {}]
  %s3 = sld [smem:[#allocation0]]
  $region30: #{tpu_custom_call.1} parent=0
    _
  %s5 = ssub.s32 1, %s3
  %s6 = scalar_select 0, %s5, %s3
  $region1: #{tpu_custom_call.1} parent=0
    #allocation2 [shape = 'u8[8192]{0}', space=vmem, size = 0x2000, scoped, tag = 'input window, operand 0, single buffered']
    #allocation3 [shape = 's32[1]{0}', space=sflag, size = 0x4, scoped, tag = 'scoped memory for tpu_custom_call.1']
    #allocation4 [shape = 's32[1]{0}', space=sflag, size = 0x4, scoped, tag = 'scoped memory for tpu_custom_call.1']
    #allocation5 [shape = 'u8[8192]{0}', space=vmem, size = 0x2000, scoped, tag = 'input window, operand 1, single buffered']
    #allocation6 [shape = 's32[1]{0}', space=sflag, size = 0x4, scoped, tag = 'scoped memory for tpu_custom_call.1']
    #allocation7 [shape = 'u8[8192]{0}', space=vmem, size = 0x2000, scoped, tag = 'output window, operand 0, single buffered']
    %7 = vsyncpa [#allocation3], 0
    %8 = vsyncpa [#allocation6], 0
    %9 = vsyncpa [#allocation4], 0
    // Predicated region
    $region2: #{tpu_custom_call.1} parent=1 // pred_check
      _
    $region3: #{tpu_custom_call.1} parent=1 // pred_check_branch
      %11 = sbr.rel (0) target = $region5
    $region4: #{tpu_custom_call.1} parent=1 // pred_region
      %s13 = ssub.s32 256, 256
      %14 = vsyncadd [#allocation3], %s13
      %s16 = sshll.u32 [#allocation2], 4
      %s17 = int_to_ptr.vmem [resolvable:$true] %s16
      %19 = dma.hbm_to_vmem [thread:$0]  %s0, 256, %s17, [#allocation3]
    $region5: #{tpu_custom_call.1} parent=1 // pred_fallthru
      _
    // Predicated region
    $region6: #{tpu_custom_call.1} parent=1 // pred_check
      _
    $region7: #{tpu_custom_call.1} parent=1 // pred_check_branch
      %21 = sbr.rel (0) target = $region9
    $region8: #{tpu_custom_call.1} parent=1 // pred_region
      %s23 = ssub.s32 256, 256
      %24 = vsyncadd [#allocation6], %s23
      %s26 = sshll.u32 [#allocation5], 4
      %s27 = int_to_ptr.vmem [resolvable:$true] %s26
      %29 = dma.hbm_to_vmem [thread:$0]  %s1, 256, %s27, [#allocation6]
    $region9: #{tpu_custom_call.1} parent=1 // pred_fallthru
      _
    // Predicated region
    $region10: #{tpu_custom_call.1} parent=1 // pred_check
      _
    $region11: #{tpu_custom_call.1} parent=1 // pred_check_branch
      %31 = sbr.rel (0) target = $region13
    $region12: #{tpu_custom_call.1} parent=1 // pred_region
      %32 = dma.done [#allocation3], 256
    $region13: #{tpu_custom_call.1} parent=1 // pred_fallthru
      _
    // Predicated region
    $region14: #{tpu_custom_call.1} parent=1 // pred_check
      _
    $region15: #{tpu_custom_call.1} parent=1 // pred_check_branch
      %34 = sbr.rel (0) target = $region17
    $region16: #{tpu_custom_call.1} parent=1 // pred_region
      %35 = dma.done [#allocation6], 256
    $region17: #{tpu_custom_call.1} parent=1 // pred_fallthru
      _
    %p36 = scmp.eq.s32.totalorder 0, 0
    // Predicated region
    $region18: #{tpu_custom_call.1} parent=1 // pred_check
      %p37 = pneg %p36
    $region19: #{tpu_custom_call.1} parent=1 // pred_check_branch
      %39 = sbr.rel (%p37) target = $region21
    $region20: #{tpu_custom_call.1} parent=1 // pred_region
      %40 = vst [vmem:[#allocation7] sm:$0xff] 0.0
      %41 = vst [vmem:[#allocation7 + $0x8] sm:$0xff] 0.0
    $region21: #{tpu_custom_call.1} parent=1 // pred_fallthru
      _
    %v42 = vld [vmem:[#allocation2] sm:$0xff]
    %v43 = vld [vmem:[#allocation2 + $0x8] sm:$0xff]
    %v44 = vld [vmem:[#allocation5] sm:$0xff]
    %v45 = vld [vmem:[#allocation5 + $0x8] sm:$0xff]
    %v46 = vlog2.pop %v42
    %v47 = vmul.f32 %v46, 0.6931472
    %v48 = vlog2.pop %v43
    %v49 = vmul.f32 %v48, 0.6931472
    %v50 = vmax.f32 %v47, -100.0
    %v51 = vmax.f32 %v49, -100.0
    %v52 = vsub.f32 1.0, %v42
    %v53 = vsub.f32 1.0, %v43
    %v54 = vlog2.pop %v52
    %v55 = vmul.f32 %v54, 0.6931472
    %v56 = vlog2.pop %v53
    %v57 = vmul.f32 %v56, 0.6931472
    %v58 = vmax.f32 %v55, -100.0
    %v59 = vmax.f32 %v57, -100.0
    %v60 = vsub.f32 %v50, %v58
    %v61 = vsub.f32 %v51, %v59
    %v62 = vmul.f32 %v44, %v60
    %v63 = vmul.f32 %v45, %v61
    %v64 = vadd.f32 %v62, %v58
    %v65 = vadd.f32 %v63, %v59
    %v66 = vld [vmem:[#allocation7] sm:$0xff]
    %v67 = vld [vmem:[#allocation7 + $0x8] sm:$0xff]
    %v68 = vadd.f32 %v64, 0.0
    %v69 = vadd.f32 %v65, 0.0
    %v70 = vadd.f32 %v66, %v68
    %v71 = vadd.f32 %v67, %v69
    %72 = vst [vmem:[#allocation7] sm:$0xff] %v70
    %73 = vst [vmem:[#allocation7 + $0x8] sm:$0xff] %v71
    // Predicated region
    $region22: #{tpu_custom_call.1} parent=1 // pred_check
      _
    $region23: #{tpu_custom_call.1} parent=1 // pred_check_branch
      %75 = sbr.rel (0) target = $region25
    $region24: #{tpu_custom_call.1} parent=1 // pred_region
      %s77 = ssub.s32 256, 256
      %78 = vsyncadd [#allocation4], %s77
      %s80 = sshll.u32 [#allocation7], 4
      %s81 = int_to_ptr.vmem [resolvable:$true] %s80
      %83 = dma.vmem_to_hbm [thread:$0]  %s81, 256, %s2, [#allocation4]
    $region25: #{tpu_custom_call.1} parent=1 // pred_fallthru
      _
    // Predicated region
    $region26: #{tpu_custom_call.1} parent=1 // pred_check
      _
    $region27: #{tpu_custom_call.1} parent=1 // pred_check_branch
      %85 = sbr.rel (0) target = $region29
    $region28: #{tpu_custom_call.1} parent=1 // pred_region
      %86 = dma.done [#allocation4], 256
    $region29: #{tpu_custom_call.1} parent=1 // pred_fallthru
      _
    %87 = vsyncpa [#allocation3], 1
    %88 = vsyncpa [#allocation6], 1
    %89 = vsyncpa [#allocation4], 1

</llo_original>
